<compile_context>
chip_gen: v5e
topology: v5e:2x2
jax: 0.10.0
libtpu: 0.0.40
codegen_flags: <defaults>
</compile_context>

<pallas_src>
import jax
import jax.numpy as jnp
from jax.experimental import pallas as pl
from jax.experimental.pallas import tpu as pltpu


def _lm_head_kernel(x_ref, w_ref, b_ref, o_ref):
    # x_ref: (TR, H) bf16   w_ref: (H, V_pad) bf16
    # b_ref: (1, V_pad) f32 o_ref: (TR, V_pad) out dtype
    acc = jnp.dot(x_ref[...], w_ref[...], preferred_element_type=jnp.float32)
    # Epilogue (bias add) kept in f32 vregs; single cast on store.
    o_ref[...] = (acc + b_ref[...]).astype(o_ref.dtype)


def _round_up(x, m):
    return ((x + m - 1) // m) * m


def small_lm_head(features, weight_t, bias, *, row_tile=512,
                  compute_dtype=jnp.bfloat16):
    """features: (B, S, H); weight_t: (H, V); bias: (V,) -> (B, S, V).

    Equivalent to: features @ weight_t + bias   (weight_t = decoder.weight.T)
    """
    B, S, H = features.shape
    V = weight_t.shape[1]
    R = B * S
    out_dtype = features.dtype

    # --- padding: lane-dense vocab, row tile a multiple of 8 -----------------
    V_pad = max(128, _round_up(V, 128))
    TR = min(_round_up(row_tile, 8), _round_up(R, 8))
    R_pad = _round_up(R, TR)

    x2d = features.reshape(R, H).astype(compute_dtype)
    if R_pad != R:
        x2d = jnp.pad(x2d, ((0, R_pad - R), (0, 0)))

    w = weight_t.astype(compute_dtype)
    b2d = bias.astype(jnp.float32).reshape(1, V)
    if V_pad != V:
        w = jnp.pad(w, ((0, 0), (0, V_pad - V)))
        b2d = jnp.pad(b2d, ((0, 0), (0, V_pad - V)))

    grid = (R_pad // TR,)

    itemsize_in = jnp.dtype(compute_dtype).itemsize
    itemsize_out = jnp.dtype(out_dtype).itemsize

    cost = pl.CostEstimate(
        flops=2 * R_pad * H * V_pad,
        transcendentals=0,
        bytes_accessed=(R_pad * H * itemsize_in          # activations
                        + H * V_pad * itemsize_in        # weight
                        + V_pad * 4                      # bias
                        + R_pad * V_pad * itemsize_out)) # logits out

    # VMEM budget: double-buffered x / out tiles + resident weight & bias,
    # plus headroom; clamped well under v7x's 64 MiB physical VMEM per TC.
    vmem_bytes = (2 * TR * H * itemsize_in
                  + 2 * TR * V_pad * itemsize_out
                  + H * V_pad * itemsize_in
                  + V_pad * 4
                  + (8 << 20))
    vmem_bytes = int(min(max(vmem_bytes, 16 << 20), 48 << 20))

    out2d = pl.pallas_call(
        _lm_head_kernel,
        out_shape=jax.ShapeDtypeStruct((R_pad, V_pad), out_dtype),
        grid=grid,
        in_specs=[
            pl.BlockSpec((TR, H), lambda i: (i, 0)),      # activations: tiled
            pl.BlockSpec((H, V_pad), lambda i: (0, 0)),   # weight: resident
            pl.BlockSpec((1, V_pad), lambda i: (0, 0)),   # bias: resident
        ],
        out_specs=pl.BlockSpec((TR, V_pad), lambda i: (i, 0)),
        compiler_params=pltpu.CompilerParams(
            dimension_semantics=("parallel",),
            vmem_limit_bytes=vmem_bytes),
        cost_estimate=cost,
    )(x2d, w, b2d)

    return out2d[:R, :V].reshape(B, S, V)


if __name__ == "__main__":
    # Small shapes consistent with the module: hidden=32, vocab=33 (ESM default).
    B, S, H, V = 2, 8, 32, 33

    key = jax.random.PRNGKey(0)
    k_feat, k_w = jax.random.split(key)

    features = jax.random.normal(k_feat, (B, S, H), dtype=jnp.float32)

    # Synthetic deterministic parameters; nn.Linear weight is (vocab, hidden),
    # stored transposed for the kernel. Bias is zeros as in the module __init__.
    decoder_weight = jax.random.normal(k_w, (V, H), dtype=jnp.float32) * 0.02
    weight_t = decoder_weight.T          # (H, V)
    bias = jnp.zeros((V,), dtype=jnp.float32)

    out = small_lm_head(features, weight_t, bias)
    out = jax.block_until_ready(out)

    # Reference (f32 throughout); bf16 MXU inputs -> loose-but-tight-enough tol.
    ref = features @ decoder_weight.T + bias
    assert out.shape == (B, S, V), out.shape
    assert jnp.allclose(out, ref, atol=1e-2, rtol=1e-2), "mismatch vs reference"

    print("KERNEL_OK")
</pallas_src>

<mosaic_0001>
module attributes {stable_mosaic.version = 11 : i64} {
  func.func @_lm_head_kernel(%arg0: i32, %arg1: memref<16x32xbf16, #tpu.memory_space<vmem>>, %arg2: memref<32x128xbf16, #tpu.memory_space<vmem>>, %arg3: memref<1x128xf32, #tpu.memory_space<vmem>>, %arg4: memref<16x128xf32, #tpu.memory_space<vmem>>) attributes {dimension_semantics = [#tpu.dimension_semantics<parallel>], iteration_bounds = array<i64: 1>, scalar_prefetch = 0 : i64, scratch_operands = 0 : i64, tpu.core_type = #tpu.core_type<tc>, window_params = [{transform_indices = @transform_0, window_bounds = array<i64: 16, 32>}, {pipeline_mode = #tpu.pipeline_mode<synchronous>, transform_indices = @transform_1, window_bounds = array<i64: 32, 128>}, {pipeline_mode = #tpu.pipeline_mode<synchronous>, transform_indices = @transform_2, window_bounds = array<i64: 1, 128>}, {transform_indices = @transform_3, window_bounds = array<i64: 16, 128>}]} {
    %c0 = arith.constant 0 : index
    %c0_0 = arith.constant 0 : index
    %0 = vector.load %arg1[%c0, %c0_0] : memref<16x32xbf16, #tpu.memory_space<vmem>>, vector<16x32xbf16>
    %c0_1 = arith.constant 0 : index
    %c0_2 = arith.constant 0 : index
    %1 = vector.load %arg2[%c0_1, %c0_2] : memref<32x128xbf16, #tpu.memory_space<vmem>>, vector<32x128xbf16>
    %cst = arith.constant dense<0.000000e+00> : vector<16x128xf32>
    %2 = tpu.matmul %0, %1, %cst {dimension_numbers = #tpu.dot_dimension_numbers<[1], [0], [0], [1], [0, 0, 1, 1], [], []>} : vector<16x32xbf16>, vector<32x128xbf16>, vector<16x128xf32> -> vector<16x128xf32>
    %c0_3 = arith.constant 0 : index
    %c0_4 = arith.constant 0 : index
    %3 = vector.load %arg3[%c0_3, %c0_4] : memref<1x128xf32, #tpu.memory_space<vmem>>, vector<1x128xf32>
    %4 = vector.broadcast %3 : vector<1x128xf32> to vector<16x128xf32>
    %5 = arith.addf %2, %4 : vector<16x128xf32>
    %c0_5 = arith.constant 0 : index
    %c0_6 = arith.constant 0 : index
    %6 = vector.load %arg4[%c0_5, %c0_6] : memref<16x128xf32, #tpu.memory_space<vmem>>, vector<16x128xf32>
    tpu.vector_store %arg4[%c0_5, %c0_6], %5 {strides = array<i32>} : memref<16x128xf32, #tpu.memory_space<vmem>>, vector<16x128xf32>,
    return
  }
  func.func @transform_0(%arg0: i32) -> (i32, i32) {
    %c0_i32 = arith.constant 0 : i32
    %c0_i32_0 = arith.constant 0 : i32
    return %arg0, %c0_i32 : i32, i32
  }
  func.func @transform_1(%arg0: i32) -> (i32, i32) {
    %c0_i32 = arith.constant 0 : i32
    %c0_i32_0 = arith.constant 0 : i32
    %c0_i32_1 = arith.constant 0 : i32
    return %c0_i32, %c0_i32_0 : i32, i32
  }
  func.func @transform_2(%arg0: i32) -> (i32, i32) {
    %c0_i32 = arith.constant 0 : i32
    %c0_i32_0 = arith.constant 0 : i32
    %c0_i32_1 = arith.constant 0 : i32
    return %c0_i32, %c0_i32_0 : i32, i32
  }
  func.func @transform_3(%arg0: i32) -> (i32, i32) {
    %c0_i32 = arith.constant 0 : i32
    %c0_i32_0 = arith.constant 0 : i32
    return %arg0, %c0_i32 : i32, i32
  }
}

</mosaic_0001>

<llo_original>
// kernel: tpu_custom_call.1
$region0: #{tpu_custom_call.1}
  #allocation0 [shape = 'u32[]', space=smem, size = 0x4, offset = 0x4, fixed_abs, tag = 'smem constant byte address 0x4 - core index']
  #allocation1 [shape = 'u32[72,128]{1,0:T(1,128)}', space=vmem, size = 0x9000, scoped, tag = 'internal scratch']
  %s0 = inlined_call_operand.hbm [shape: bf16[16,32], index: 0, kind: input, shape index: {}]
  %s1 = inlined_call_operand.hbm [shape: bf16[32,128], index: 1, kind: input, shape index: {}]
  %s2 = inlined_call_operand.vmem [shape: f32[1,128], index: 2, kind: input, shape index: {}]
  %s3 = inlined_call_operand.hbm [shape: f32[16,128], index: 3, kind: output, shape index: {}]
  %s4 = sld [smem:[#allocation0]]
  $region30: #{tpu_custom_call.1} parent=0
    _
  %s6 = ssub.s32 1, %s4
  %s7 = scalar_select 0, %s6, %s4
  $region1: #{tpu_custom_call.1} parent=0
    #allocation2 [shape = 'u8[4096]{0}', space=vmem, size = 0x1000, scoped, tag = 'input window, operand 0, single buffered']
    #allocation3 [shape = 's32[1]{0}', space=sflag, size = 0x4, scoped, tag = 'scoped memory for tpu_custom_call.1']
    #allocation4 [shape = 's32[1]{0}', space=sflag, size = 0x4, scoped, tag = 'scoped memory for tpu_custom_call.1']
    #allocation5 [shape = 'u8[8192]{0}', space=vmem, size = 0x2000, scoped, tag = 'input window, operand 1, single buffered']
    #allocation6 [shape = 's32[1]{0}', space=sflag, size = 0x4, scoped, tag = 'scoped memory for tpu_custom_call.1']
    #allocation7 [shape = 'u8[8192]{0}', space=vmem, size = 0x2000, scoped, tag = 'output window, operand 0, single buffered']
    %8 = vsyncpa [#allocation3], 0
    %9 = vsyncpa [#allocation6], 0
    %10 = vsyncpa [#allocation4], 0
    // Predicated region
    $region2: #{tpu_custom_call.1} parent=1 // pred_check
      _
    $region3: #{tpu_custom_call.1} parent=1 // pred_check_branch
      %12 = sbr.rel (0) target = $region5
    $region4: #{tpu_custom_call.1} parent=1 // pred_region
      %14 = vsyncadd [#allocation3], 0
      %s15 = sshll.u32 %s0, 4
      %s16 = int_to_ptr.hbm [resolvable:$true] %s15
      %s17 = sshll.u32 [#allocation2], 4
      %s18 = int_to_ptr.vmem [resolvable:$true] %s17
      %23 = dma.hbm_to_vmem [thread:$0]  %s16, 128, %s18, [#allocation3], 64, 64, 4
    $region5: #{tpu_custom_call.1} parent=1 // pred_fallthru
      _
    // Predicated region
    $region6: #{tpu_custom_call.1} parent=1 // pred_check
      _
    $region7: #{tpu_custom_call.1} parent=1 // pred_check_branch
      %25 = sbr.rel (0) target = $region9
    $region8: #{tpu_custom_call.1} parent=1 // pred_region
      %27 = vsyncadd [#allocation6], 0
      %s28 = sshll.u32 %s1, 4
      %s29 = int_to_ptr.hbm [resolvable:$true] %s28
      %s30 = sshll.u32 [#allocation5], 4
      %s31 = int_to_ptr.vmem [resolvable:$true] %s30
      %36 = dma.hbm_to_vmem [thread:$0]  %s29, 256, %s31, [#allocation6], 64, 64, 4
    $region9: #{tpu_custom_call.1} parent=1 // pred_fallthru
      _
    // Predicated region
    $region10: #{tpu_custom_call.1} parent=1 // pred_check
      _
    $region11: #{tpu_custom_call.1} parent=1 // pred_check_branch
      %38 = sbr.rel (0) target = $region13
    $region12: #{tpu_custom_call.1} parent=1 // pred_region
      _
    $region13: #{tpu_custom_call.1} parent=1 // pred_fallthru
      _
    // Predicated region
    $region14: #{tpu_custom_call.1} parent=1 // pred_check
      _
    $region15: #{tpu_custom_call.1} parent=1 // pred_check_branch
      %40 = sbr.rel (0) target = $region17
    $region16: #{tpu_custom_call.1} parent=1 // pred_region
      %42 = dma.done [#allocation3], 128
    $region17: #{tpu_custom_call.1} parent=1 // pred_fallthru
      _
    // Predicated region
    $region18: #{tpu_custom_call.1} parent=1 // pred_check
      _
    $region19: #{tpu_custom_call.1} parent=1 // pred_check_branch
      %44 = sbr.rel (0) target = $region21
    $region20: #{tpu_custom_call.1} parent=1 // pred_region
      %46 = dma.done [#allocation6], 256
    $region21: #{tpu_custom_call.1} parent=1 // pred_fallthru
      _
    %v48 = vld [vmem:[#allocation2] sm:$0xf]
    %v49 = vld [vmem:[#allocation2 + $0x4] sm:$0xf]
    %v50 = vld [vmem:[#allocation5] sm:$0xf]
    %v51 = vld [vmem:[#allocation5 + $0x4] sm:$0xf]
    %v52 = vld [vmem:[#allocation5 + $0x8] sm:$0xf]
    %v53 = vld [vmem:[#allocation5 + $0xc] sm:$0xf]
    %v54 = vld [vmem:[%s2] sm:$0x1]
    %v56 = vperm.slane %v54, 0
    %v60 = vunpack.c.l.b16 %v48
    %v61 = vunpack.c.l.b16 %v49
    %v62 = vpack.c.b16 %v61, %v60
    %v67 = vunpack.c.l.b16 %v50
    %v68 = vunpack.c.l.b16 %v51
    %v69 = vunpack.c.l.b16 %v52
    %v70 = vunpack.c.l.b16 %v53
    %v71 = vpack.c.b16 %v68, %v67
    %v72 = vpack.c.b16 %v70, %v69
    %vm75 = vcmask 261120
    %v77 = vsel %vm75, %v62, 0
    %79 = vmatpush.bf16.msra.mxu0 0
    %80 = vmatpush.bf16.msra.mxu0 0
    %81 = vmatpush.bf16.msra.mxu0 0
    %82 = vmatpush.bf16.msra.mxu0 0
    %83 = vmatpush.bf16.msra.mxu0 0
    %84 = vmatpush.bf16.msra.mxu0 0
    %85 = vmatpush.bf16.msra.mxu0 %v72
    %86 = vmatpush.bf16.msra.mxu0 %v71
    %87 = vmatmul.bf16.gmra.mxu0 %v77
    %v88 = vpop.f32.mrf.mxu0
    %v89 = vadd.f32 %v56, %v88
    %v90 = vpop.f32.mrf.mxu0
    %v91 = vadd.f32 %v56, %v90
    %92 = vdwg.mxu0
    %93 = vst [vmem:[#allocation7] sm:$0xff] %v89
    %94 = vst [vmem:[#allocation7 + $0x8] sm:$0xff] %v91
    // Predicated region
    $region22: #{tpu_custom_call.1} parent=1 // pred_check
      _
    $region23: #{tpu_custom_call.1} parent=1 // pred_check_branch
      %96 = sbr.rel (0) target = $region25
    $region24: #{tpu_custom_call.1} parent=1 // pred_region
      %98 = vsyncadd [#allocation4], 0
      %s99 = sshll.u32 [#allocation7], 4
      %s100 = int_to_ptr.vmem [resolvable:$true] %s99
      %s101 = sshll.u32 %s3, 4
      %s102 = int_to_ptr.hbm [resolvable:$true] %s101
      %107 = dma.vmem_to_hbm [thread:$0]  %s100, 256, %s102, [#allocation4], 128, 128, 8
    $region25: #{tpu_custom_call.1} parent=1 // pred_fallthru
      _
    // Predicated region
    $region26: #{tpu_custom_call.1} parent=1 // pred_check
      _
    $region27: #{tpu_custom_call.1} parent=1 // pred_check_branch
      %109 = sbr.rel (0) target = $region29
    $region28: #{tpu_custom_call.1} parent=1 // pred_region
      %111 = dma.done [#allocation4], 256
    $region29: #{tpu_custom_call.1} parent=1 // pred_fallthru
      _
    %112 = vsyncpa [#allocation3], 1
    %113 = vsyncpa [#allocation6], 1
    %114 = vsyncpa [#allocation4], 1

</llo_original>
